<compile_context>
chip_gen: v7x
topology: tpu7x:2x2x1
jax: 0.10.0
libtpu: 0.0.40
codegen_flags: <defaults>
</compile_context>

<pallas_src>
import functools
import math

import jax
import jax.numpy as jnp
import numpy as np
from jax import lax
from jax.experimental import pallas as pl
from jax.experimental.pallas import tpu as pltpu

_LANE = 128


def _cdiv(a, b):
    return -(-a // b)


# --------------------------- VMEM budget / tiling ----------------------------
def _vmem_caps():
    """(physical VMEM capacity, per-kernel working-set budget)."""
    try:
        cap = int(pltpu.get_tpu_info().vmem_capacity_bytes)  # 128 MiB v5e/v6e, 64 MiB v7x
    except Exception:
        cap = 64 << 20                                       # conservative fallback (v7x)
    # The kernel is HBM-bound: past ~512-wide tiles the roofline fraction saturates,
    # so keep the working set modest and leave slack for Mosaic-internal scratch
    # (v7x only has 64 MiB total).
    budget = min(24 << 20, cap // 3)
    return cap, budget


def _choose_tiles(N, K, Nc, S, x_bytes, w_bytes, out_bytes, budget):
    """Pick (tn, ts) tiles for the (Nc, S) per-batch output slab."""
    # Nc tile: full Nc when small (block == full dim is always legal), else 256 to
    # match the 256-wide v6e/v7x MXU; the cdiv tail is masked automatically.
    tn = Nc if Nc <= 256 else 256
    nc_tiles = _cdiv(Nc, tn)

    # Resident blocks (worst case: double-buffered W/bias if Buffered(1) unavailable).
    const_bytes = 2 * tn * K * w_bytes + 2 * tn * 4
    per_col = 2 * K * x_bytes + 2 * tn * out_bytes  # streamed X + Out, double-buffered

    if S <= _LANE:
        ts = S           # block == full dim (partial-lane stores; tiny shapes only)
    else:
        ts_cap = max(_LANE, (budget - const_bytes) // per_col)
        ts = min(2048, ts_cap, (S // _LANE) * _LANE)
        ts = max(_LANE, (ts // _LANE) * _LANE)
        # Prefer >= ~8 total grid steps (>= 4 per v7x TensorCore) when the problem
        # allows, so the X-in / O-out DMAs are hidden instead of being pure
        # prologue/epilogue.
        target_s = max(1, _cdiv(8, N * nc_tiles))
        while ts > _LANE and _cdiv(S, ts) < target_s:
            ts -= _LANE
    s_tiles = _cdiv(S, ts)
    needed = const_bytes + per_col * ts
    return tn, nc_tiles, ts, s_tiles, needed


# ----------------------------- Pallas kernel --------------------------------
def _deconv_gemm_kernel(w_ref, x_ref, b_ref, o_ref, *, compute_dtype):
    # w_ref: (tn, K) compute_dtype   x_ref: (K, ts) native input dtype
    # b_ref: (tn, 1) f32             o_ref: (tn, ts) out dtype
    x = x_ref[...].astype(compute_dtype)   # in-kernel cast: saves a wrapper HBM pass
    acc = jnp.dot(w_ref[...], x, preferred_element_type=jnp.float32)
    o_ref[...] = (acc + b_ref[...]).astype(o_ref.dtype)


def _deconv_gemm(x3, w_t, b_col, *, compute_dtype, out_dtype):
    """x3: (N, K, S) native dtype, w_t: (Nc, K) compute_dtype, b_col: (Nc, 1) f32
       -> (N, Nc, S) out_dtype with out[n, :, s] = w_t @ x3[n, :, s] + b."""
    N, K, S = x3.shape
    Nc = w_t.shape[0]
    x_bytes = jnp.dtype(x3.dtype).itemsize
    w_bytes = jnp.dtype(w_t.dtype).itemsize
    out_bytes = jnp.dtype(out_dtype).itemsize

    cap, budget = _vmem_caps()
    tn, nc_tiles, ts, s_tiles, needed = _choose_tiles(
        N, K, Nc, S, x_bytes, w_bytes, out_bytes, budget)
    vmem_limit = int(min(cap * 3 // 4, max(32 << 20, needed + (8 << 20))))

    cost = pl.CostEstimate(
        flops=2 * N * Nc * S * K,
        transcendentals=0,
        bytes_accessed=(N * K * S * x_bytes + Nc * K * w_bytes + Nc * 4
                        + N * Nc * S * out_bytes),
    )
    kernel = functools.partial(_deconv_gemm_kernel, compute_dtype=compute_dtype)

    def build(single_buffer_const):
        # W / bias are constant over (n, s); when they are constant over the whole
        # grid (nc_tiles == 1) keep a single resident copy instead of a wasted 2nd
        # buffer (frees VMEM for the streamed X / Out blocks — matters most on v7x).
        const_kwargs = {}
        if single_buffer_const and nc_tiles == 1 and hasattr(pl, "Buffered"):
            const_kwargs = dict(pipeline_mode=pl.Buffered(1))
        in_specs = [
            pl.BlockSpec((tn, K), lambda n, j, s: (j, 0), **const_kwargs),
            pl.BlockSpec((None, K, ts), lambda n, j, s: (n, 0, s)),
            pl.BlockSpec((tn, 1), lambda n, j, s: (j, 0), **const_kwargs),
        ]
        out_specs = pl.BlockSpec((None, tn, ts), lambda n, j, s: (n, j, s))
        return pl.pallas_call(
            kernel,
            out_shape=jax.ShapeDtypeStruct((N, Nc, S), out_dtype),
            grid_spec=pltpu.PrefetchScalarGridSpec(
                num_scalar_prefetch=0,
                grid=(N, nc_tiles, s_tiles),
                in_specs=in_specs,
                out_specs=out_specs,
            ),
            compiler_params=pltpu.CompilerParams(
                dimension_semantics=("parallel", "parallel", "parallel"),
                vmem_limit_bytes=vmem_limit,
            ),
            cost_estimate=cost,
        )

    try:
        return build(True)(w_t, x3, b_col)
    except Exception:
        # pl.Buffered(1) not supported by this jax build -> default double-buffering.
        return build(False)(w_t, x3, b_col)


# ------------------------------ module wrapper -------------------------------
class UpConvWithCopyCrop:
    """JAX/Pallas port of the PyTorch module (forward pass only)."""

    def __init__(self, n_in_channels, n_out_channels, kernel_size=2, stride=2,
                 key=jax.random.PRNGKey(0), compute_dtype=jnp.bfloat16, out_dtype=None):
        assert kernel_size == 2 and stride == 2, "non-overlapping deconv only"
        self.c_in = n_in_channels
        self.c_out = n_out_channels
        self.k = kernel_size
        # MXU compute dtype: bf16 by default (f32 accumulate); pass jnp.float32 for
        # bit-closer results to the f32 PyTorch module.
        self.compute_dtype = compute_dtype
        self.out_dtype = out_dtype          # None -> follow the input dtype
        kw_key, b_key = jax.random.split(key)
        # PyTorch ConvTranspose2d weight shape: (C_in, C_out, kH, kW)
        fan_in = n_in_channels * kernel_size * kernel_size
        bound = 1.0 / math.sqrt(fan_in)
        self.weight = jax.random.uniform(
            kw_key, (n_in_channels, n_out_channels, kernel_size, kernel_size),
            jnp.float32, -bound, bound)
        self.bias = jax.random.uniform(
            b_key, (n_out_channels,), jnp.float32, -bound, bound)

    def __call__(self, up_conv_input, copy_crop_input):
        N, C_in, H, W = up_conv_input.shape
        assert C_in == self.c_in
        C_out, k = self.c_out, self.k
        Nc, S = C_out * k * k, H * W
        out_dtype = self.out_dtype if self.out_dtype is not None else up_conv_input.dtype

        # ---- ConvTranspose2d(k=2, s=2) as a flipped GEMM (spatial dim on lanes) ----
        # NCHW -> (N, C_in, H*W) is a free reshape: no transpose, no column padding.
        x3 = up_conv_input.reshape(N, C_in, S)
        # W^T: (Nc, C_in), row index = co*k*k + kh*k + kw; tiny, cast once.
        w_t = jnp.transpose(self.weight.reshape(C_in, Nc)).astype(self.compute_dtype)
        b_col = jnp.repeat(self.bias, k * k).reshape(Nc, 1).astype(jnp.float32)

        gemm = _deconv_gemm(x3, w_t, b_col,
                            compute_dtype=self.compute_dtype, out_dtype=out_dtype)

        # 2x2 sub-pixel interleave: (N, C_out, kh, kw, H, W) -> (N, C_out, 2H, 2W).
        # TODO(synk): the sub-pixel interleave and the channel concat below remain XLA
        # glue; a rectangular output BlockSpec cannot express the 2x2 scatter.
        up_out = gemm.reshape(N, C_out, k, k, H, W)
        up_out = jnp.transpose(up_out, (0, 1, 4, 2, 5, 3)).reshape(
            N, C_out, H * k, W * k)

        # ---- pad/crop of the skip connection (exact PyTorch-module semantics) ----
        Hup, Wup = H * k, W * k
        Hc, Wc = copy_crop_input.shape[2], copy_crop_input.shape[3]
        height_diff, width_diff = Hup - Hc, Wup - Wc
        # F.pad(x, (a, b, c, d)) pads WIDTH by (a, b) and HEIGHT by (c, d); the
        # reference module passes the height_diff halves first, so width gets the
        # height_diff padding and vice versa.  Reproduced exactly (negative diffs crop).
        pad_w_lo, pad_w_hi = height_diff // 2, int(height_diff / 2)
        pad_h_lo, pad_h_hi = width_diff // 2, int(width_diff / 2)
        copy_crop_output = lax.pad(
            copy_crop_input, jnp.array(0.0, copy_crop_input.dtype),
            ((0, 0, 0), (0, 0, 0), (pad_h_lo, pad_h_hi, 0), (pad_w_lo, pad_w_hi, 0)))

        # ---- channel concat with an explicitly pinned dtype (no silent promotion) ----
        cat_dtype = jnp.result_type(up_out.dtype, copy_crop_output.dtype)
        return jnp.concatenate([copy_crop_output.astype(cat_dtype),
                                up_out.astype(cat_dtype)], axis=1)


# --------------------------------- demo --------------------------------------
if __name__ == "__main__":
    key = jax.random.PRNGKey(0)
    k_x, k_skip, k_params = jax.random.split(key, 3)

    N, C_in, H, W = 2, 8, 8, 8          # up-conv input  -> upsampled to 16x16
    C_skip, Hs, Ws = 4, 12, 12          # skip connection -> padded to 16x16
    C_out = 4

    up_conv_input = jax.random.normal(k_x, (N, C_in, H, W), jnp.float32)
    copy_crop_input = jax.random.normal(k_skip, (N, C_skip, Hs, Ws), jnp.float32)

    module = UpConvWithCopyCrop(C_in, C_out, kernel_size=2, stride=2, key=k_params)
    out = jax.block_until_ready(module(up_conv_input, copy_crop_input))

    expected_shape = (N, C_skip + C_out, 2 * H, 2 * W)
    assert out.shape == expected_shape, (out.shape, expected_shape)

    # pure-JAX reference (bf16-rounded inputs, f32 accumulation -> tight tolerance)
    xq = up_conv_input.astype(jnp.bfloat16).astype(jnp.float32)
    wq = module.weight.astype(jnp.bfloat16).astype(jnp.float32)
    ref_up = jnp.einsum("nchw,coyx->nohywx", xq, wq,
                        precision=lax.Precision.HIGHEST)
    ref_up = ref_up.reshape(N, C_out, 2 * H, 2 * W) + module.bias[None, :, None, None]
    hd, wd = 2 * H - Hs, 2 * W - Ws
    ref_skip = lax.pad(copy_crop_input, jnp.float32(0.0),
                       ((0, 0, 0), (0, 0, 0),
                        (wd // 2, int(wd / 2), 0), (hd // 2, int(hd / 2), 0)))
    ref = jnp.concatenate([ref_skip, ref_up], axis=1)
    np.testing.assert_allclose(np.asarray(out), np.asarray(ref), rtol=1e-3, atol=1e-3)

    print("KERNEL_OK")
</pallas_src>

<mosaic_0001>
module attributes {stable_mosaic.version = 11 : i64} {
  func.func @_deconv_gemm_kernel(%arg0: i32, %arg1: i32, %arg2: i32, %arg3: memref<16x8xbf16, #tpu.memory_space<vmem>>, %arg4: memref<1x8x64xf32, #tpu.memory_space<vmem>>, %arg5: memref<16x1xf32, #tpu.memory_space<vmem>>, %arg6: memref<1x16x64xf32, #tpu.memory_space<vmem>>) attributes {dimension_semantics = [#tpu.dimension_semantics<parallel>, #tpu.dimension_semantics<parallel>, #tpu.dimension_semantics<parallel>], iteration_bounds = array<i64: 2, 1, 1>, scalar_prefetch = 0 : i64, scratch_operands = 0 : i64, tpu.core_type = #tpu.core_type<tc>, window_params = [{pipeline_mode = #tpu.pipeline_mode<synchronous>, transform_indices = @transform_0, window_bounds = array<i64: 16, 8>}, {transform_indices = @transform_1, window_bounds = array<i64: 1, 8, 64>}, {pipeline_mode = #tpu.pipeline_mode<synchronous>, transform_indices = @transform_2, window_bounds = array<i64: 16, 1>}, {transform_indices = @transform_3, window_bounds = array<i64: 1, 16, 64>}]} {
    %c0 = arith.constant 0 : index
    %c0_0 = arith.constant 0 : index
    %c0_1 = arith.constant 0 : index
    %0 = vector.load %arg4[%c0, %c0_0, %c0_1] : memref<1x8x64xf32, #tpu.memory_space<vmem>>, vector<1x8x64xf32>
    %1 = vector.shape_cast %0 : vector<1x8x64xf32> to vector<8x64xf32>
    %2 = arith.truncf %1 : vector<8x64xf32> to vector<8x64xbf16>
    %c0_2 = arith.constant 0 : index
    %c0_3 = arith.constant 0 : index
    %3 = vector.load %arg3[%c0_2, %c0_3] : memref<16x8xbf16, #tpu.memory_space<vmem>>, vector<16x8xbf16>
    %cst = arith.constant dense<0.000000e+00> : vector<16x64xf32>
    %4 = tpu.matmul %3, %2, %cst {dimension_numbers = #tpu.dot_dimension_numbers<[1], [0], [0], [1], [0, 0, 1, 1], [], []>} : vector<16x8xbf16>, vector<8x64xbf16>, vector<16x64xf32> -> vector<16x64xf32>
    %c0_4 = arith.constant 0 : index
    %c0_5 = arith.constant 0 : index
    %5 = vector.load %arg5[%c0_4, %c0_5] : memref<16x1xf32, #tpu.memory_space<vmem>>, vector<16x1xf32>
    %6 = vector.broadcast %5 : vector<16x1xf32> to vector<16x64xf32>
    %7 = arith.addf %4, %6 : vector<16x64xf32>
    %c0_6 = arith.constant 0 : index
    %c0_7 = arith.constant 0 : index
    %c0_8 = arith.constant 0 : index
    %8 = vector.load %arg6[%c0_6, %c0_7, %c0_8] : memref<1x16x64xf32, #tpu.memory_space<vmem>>, vector<1x16x64xf32>
    %9 = vector.shape_cast %8 : vector<1x16x64xf32> to vector<16x64xf32>
    %10 = vector.shape_cast %7 : vector<16x64xf32> to vector<1x16x64xf32>
    tpu.vector_store %arg6[%c0_6, %c0_7, %c0_8], %10 {strides = array<i32>} : memref<1x16x64xf32, #tpu.memory_space<vmem>>, vector<1x16x64xf32>,
    return
  }
  func.func @transform_0(%arg0: i32, %arg1: i32, %arg2: i32) -> (i32, i32) {
    %c0_i32 = arith.constant 0 : i32
    %c0_i32_0 = arith.constant 0 : i32
    return %arg1, %c0_i32 : i32, i32
  }
  func.func @transform_1(%arg0: i32, %arg1: i32, %arg2: i32) -> (i32, i32, i32) {
    %c0_i32 = arith.constant 0 : i32
    %c0_i32_0 = arith.constant 0 : i32
    return %arg0, %c0_i32, %arg2 : i32, i32, i32
  }
  func.func @transform_2(%arg0: i32, %arg1: i32, %arg2: i32) -> (i32, i32) {
    %c0_i32 = arith.constant 0 : i32
    %c0_i32_0 = arith.constant 0 : i32
    return %arg1, %c0_i32 : i32, i32
  }
  func.func @transform_3(%arg0: i32, %arg1: i32, %arg2: i32) -> (i32, i32, i32) {
    %c0_i32 = arith.constant 0 : i32
    return %arg0, %arg1, %arg2 : i32, i32, i32
  }
}

module attributes {stable_mosaic.version = 11 : i64} {
  func.func @_deconv_gemm_kernel(%arg0: i32, %arg1: i32, %arg2: i32, %arg3: memref<16x8xbf16, #tpu.memory_space<vmem>>, %arg4: memref<1x8x64xf32, #tpu.memory_space<vmem>>, %arg5: memref<16x1xf32, #tpu.memory_space<vmem>>, %arg6: memref<1x16x64xf32, #tpu.memory_space<vmem>>) attributes {dimension_semantics = [#tpu.dimension_semantics<parallel>, #tpu.dimension_semantics<parallel>, #tpu.dimension_semantics<parallel>], iteration_bounds = array<i64: 2, 1, 1>, scalar_prefetch = 0 : i64, scratch_operands = 0 : i64, tpu.core_type = #tpu.core_type<tc>, window_params = [{transform_indices = @transform_0, window_bounds = array<i64: 16, 8>}, {transform_indices = @transform_1, window_bounds = array<i64: 1, 8, 64>}, {transform_indices = @transform_2, window_bounds = array<i64: 16, 1>}, {transform_indices = @transform_3, window_bounds = array<i64: 1, 16, 64>}]} {
    %c0 = arith.constant 0 : index
    %c0_0 = arith.constant 0 : index
    %c0_1 = arith.constant 0 : index
    %0 = vector.load %arg4[%c0, %c0_0, %c0_1] : memref<1x8x64xf32, #tpu.memory_space<vmem>>, vector<1x8x64xf32>
    %1 = vector.shape_cast %0 : vector<1x8x64xf32> to vector<8x64xf32>
    %2 = arith.truncf %1 : vector<8x64xf32> to vector<8x64xbf16>
    %c0_2 = arith.constant 0 : index
    %c0_3 = arith.constant 0 : index
    %3 = vector.load %arg3[%c0_2, %c0_3] : memref<16x8xbf16, #tpu.memory_space<vmem>>, vector<16x8xbf16>
    %cst = arith.constant dense<0.000000e+00> : vector<16x64xf32>
    %4 = tpu.matmul %3, %2, %cst {dimension_numbers = #tpu.dot_dimension_numbers<[1], [0], [0], [1], [0, 0, 1, 1], [], []>} : vector<16x8xbf16>, vector<8x64xbf16>, vector<16x64xf32> -> vector<16x64xf32>
    %c0_4 = arith.constant 0 : index
    %c0_5 = arith.constant 0 : index
    %5 = vector.load %arg5[%c0_4, %c0_5] : memref<16x1xf32, #tpu.memory_space<vmem>>, vector<16x1xf32>
    %6 = vector.broadcast %5 : vector<16x1xf32> to vector<16x64xf32>
    %7 = arith.addf %4, %6 : vector<16x64xf32>
    %c0_6 = arith.constant 0 : index
    %c0_7 = arith.constant 0 : index
    %c0_8 = arith.constant 0 : index
    %8 = vector.load %arg6[%c0_6, %c0_7, %c0_8] : memref<1x16x64xf32, #tpu.memory_space<vmem>>, vector<1x16x64xf32>
    %9 = vector.shape_cast %8 : vector<1x16x64xf32> to vector<16x64xf32>
    %10 = vector.shape_cast %7 : vector<16x64xf32> to vector<1x16x64xf32>
    tpu.vector_store %arg6[%c0_6, %c0_7, %c0_8], %10 {strides = array<i32>} : memref<1x16x64xf32, #tpu.memory_space<vmem>>, vector<1x16x64xf32>,
    return
  }
  func.func @transform_0(%arg0: i32, %arg1: i32, %arg2: i32) -> (i32, i32) {
    %c0_i32 = arith.constant 0 : i32
    %c0_i32_0 = arith.constant 0 : i32
    return %arg1, %c0_i32 : i32, i32
  }
  func.func @transform_1(%arg0: i32, %arg1: i32, %arg2: i32) -> (i32, i32, i32) {
    %c0_i32 = arith.constant 0 : i32
    %c0_i32_0 = arith.constant 0 : i32
    return %arg0, %c0_i32, %arg2 : i32, i32, i32
  }
  func.func @transform_2(%arg0: i32, %arg1: i32, %arg2: i32) -> (i32, i32) {
    %c0_i32 = arith.constant 0 : i32
    %c0_i32_0 = arith.constant 0 : i32
    return %arg1, %c0_i32 : i32, i32
  }
  func.func @transform_3(%arg0: i32, %arg1: i32, %arg2: i32) -> (i32, i32, i32) {
    %c0_i32 = arith.constant 0 : i32
    return %arg0, %arg1, %arg2 : i32, i32, i32
  }
}

</mosaic_0001>

<llo_original>
// kernel: tpu_custom_call.1
$region0: #{tpu_custom_call.1}
  #allocation0 [shape = 'u32[]', space=smem, size = 0x4, offset = 0x4, fixed_abs, tag = 'smem constant byte address 0x4 - core index']
  #allocation1 [shape = 'u32[144,128]{1,0:T(1,128)}', space=vmem, size = 0x12000, scoped, tag = 'internal scratch']
  %s0 = inlined_call_operand.vmem [shape: bf16[16,8], index: 0, kind: input, shape index: {}]
  %s1 = inlined_call_operand.vmem [shape: f32[2,8,64], index: 1, kind: input, shape index: {}]
  %s2 = inlined_call_operand.vmem [shape: f32[16,1], index: 2, kind: input, shape index: {}]
  %s3 = inlined_call_operand.hbm [shape: f32[2,16,64], index: 3, kind: output, shape index: {}]
  %s4 = sld [smem:[#allocation0]]
  $region45: #{tpu_custom_call.1} parent=0
    _
  %s6 = ssub.s32 1, %s4
  %s7 = scalar_select 0, %s6, %s4
  $region1: #{tpu_custom_call.1} parent=0
    #allocation2 [shape = 'u8[16384]{0}', space=vmem, size = 0x4000, scoped, tag = 'output window, operand 0']
    #allocation3 [shape = 's32[2]{0}', space=sflag, size = 0x8, scoped, tag = 'scoped memory for tpu_custom_call.1']
    %8 = vsyncpa [#allocation3], 0
    %s9 = scalar_lea.sflag [#allocation3], 1
    %10 = vsyncpa %s9, 0
    loop: start=0, step=1, limit=4
    $region2: #{tpu_custom_call.1} parent=1 // loop_pre_header
      _
    $region3: #{tpu_custom_call.1} parent=1 // loop_header
      %s12 = sphi 0, %s16
      %p13 = scmp.ge.s32.totalorder %s12, 4
      %s19 = sphi 0, %s38
      %s20 = sphi 0, %s34
      %s21 = sphi 0, %s30
      %s22 = sphi 0, %s19
      %s23 = sphi 0, %s20
      %s24 = sphi 0, %s21
      %s25 = sphi 0, %s22
      %s26 = sphi 0, %s23
      %s27 = sphi 0, %s24
      %s41 = sphi 0, %s43
      %s44 = sphi 0, %s41
      %s45 = sphi 0, %s44
      %s61 = sphi 0, %s45
      %s69 = sphi 0, %s71
      %s72 = sphi 0, %s69
      %s73 = sphi 0, %s72
      %s89 = sphi 0, %s73
      %s95 = sphi 0, %s97
      %s98 = sphi 0, %s95
      %s99 = sphi 0, %s98
      %s115 = sphi 0, %s99
      %s125 = sphi 0, %s127
      %s128 = sphi 0, %s125
      %s129 = sphi 0, %s128
      %s145 = sphi 0, %s129
    $region4: #{tpu_custom_call.1} parent=1 // loop_header_branch
      %15 = sbr.rel (%p13) target = $region8
    $region5: #{tpu_custom_call.1} parent=1 // loop_body
      %s17 = ssub.s32 %s12, 1
      %s18 = ssub.s32 %s12, 2
      %s28 = sadd.s32 1, %s21
      %p29 = scmp.ge.s32.totalorder %s28, 1
      %s30 = scalar_select %p29, 0, %s28
      %s31 = sadd.s32 1, %s20
      %s32 = scalar_select %p29, %s31, %s20
      %p33 = scmp.ge.s32.totalorder %s32, 1
      %s34 = scalar_select %p33, 0, %s32
      %s35 = sadd.s32 1, %s19
      %s36 = scalar_select %p33, %s35, %s19
      %p37 = scmp.ge.s32.totalorder %s36, 2
      %s38 = scalar_select %p37, 0, %s36
      %s39 = ssub.s32 %s20, %s34
      %p40 = scmp.eq.s32.totalorder %s39, 0
      %s42 = sadd.s32 %s41, 1
      %s43 = scalar_select %p40, %s41, %s42
      %p46 = pneg %p40
      %p47 = scmp.eq.s32.totalorder %s12, 1
      %p48 = por %p46, %p47
      %p49 = scmp.ne.s32.totalorder %s41, %s44
      %p50 = scmp.eq.s32.totalorder %s12, 0
      %p51 = por %p49, %p50
      %p52 = scmp.ne.s32.totalorder %s41, %s44
      %p53 = scmp.eq.s32.totalorder %s17, 1
      %p54 = por %p52, %p53
      %p55 = scmp.ne.s32.totalorder %s44, %s45
      %p56 = scmp.eq.s32.totalorder %s17, 0
      %p57 = por %p55, %p56
      %p58 = scmp.ne.s32.totalorder %s44, %s45
      %p59 = scmp.eq.s32.totalorder %s18, 1
      %p60 = por %p58, %p59
      %p62 = scmp.ne.s32.totalorder %s45, %s61
      %p63 = scmp.eq.s32.totalorder %s18, 0
      %p64 = por %p62, %p63
      %s65 = ssub.s32 %s19, %s38
      %s66 = ssub.s32 %s21, %s30
      %s67 = sor.u32 %s65, %s66
      %p68 = scmp.eq.s32.totalorder %s67, 0
      %s70 = sadd.s32 %s69, 1
      %s71 = scalar_select %p68, %s69, %s70
      %p74 = pneg %p68
      %p75 = scmp.eq.s32.totalorder %s12, 1
      %p76 = por %p74, %p75
      %p77 = scmp.ne.s32.totalorder %s69, %s72
      %p78 = scmp.eq.s32.totalorder %s12, 0
      %p79 = por %p77, %p78
      %p80 = scmp.ne.s32.totalorder %s69, %s72
      %p81 = scmp.eq.s32.totalorder %s17, 1
      %p82 = por %p80, %p81
      %p83 = scmp.ne.s32.totalorder %s72, %s73
      %p84 = scmp.eq.s32.totalorder %s17, 0
      %p85 = por %p83, %p84
      %p86 = scmp.ne.s32.totalorder %s72, %s73
      %p87 = scmp.eq.s32.totalorder %s18, 1
      %p88 = por %p86, %p87
      %p90 = scmp.ne.s32.totalorder %s73, %s89
      %p91 = scmp.eq.s32.totalorder %s18, 0
      %p92 = por %p90, %p91
      %s93 = ssub.s32 %s20, %s34
      %p94 = scmp.eq.s32.totalorder %s93, 0
      %s96 = sadd.s32 %s95, 1
      %s97 = scalar_select %p94, %s95, %s96
      %p100 = pneg %p94
      %p101 = scmp.eq.s32.totalorder %s12, 1
      %p102 = por %p100, %p101
      %p103 = scmp.ne.s32.totalorder %s95, %s98
      %p104 = scmp.eq.s32.totalorder %s12, 0
      %p105 = por %p103, %p104
      %p106 = scmp.ne.s32.totalorder %s95, %s98
      %p107 = scmp.eq.s32.totalorder %s17, 1
      %p108 = por %p106, %p107
      %p109 = scmp.ne.s32.totalorder %s98, %s99
      %p110 = scmp.eq.s32.totalorder %s17, 0
      %p111 = por %p109, %p110
      %p112 = scmp.ne.s32.totalorder %s98, %s99
      %p113 = scmp.eq.s32.totalorder %s18, 1
      %p114 = por %p112, %p113
      %p116 = scmp.ne.s32.totalorder %s99, %s115
      %p117 = scmp.eq.s32.totalorder %s18, 0
      %p118 = por %p116, %p117
      %s119 = ssub.s32 %s19, %s38
      %s120 = ssub.s32 %s20, %s34
      %s121 = sor.u32 %s119, %s120
      %s122 = ssub.s32 %s21, %s30
      %s123 = sor.u32 %s121, %s122
      %p124 = scmp.eq.s32.totalorder %s123, 0
      %s126 = sadd.s32 %s125, 1
      %s127 = scalar_select %p124, %s125, %s126
      %p130 = pneg %p124
      %p131 = scmp.eq.s32.totalorder %s12, 1
      %p132 = por %p130, %p131
      %p133 = scmp.ne.s32.totalorder %s125, %s128
      %p134 = scmp.eq.s32.totalorder %s12, 0
      %p135 = por %p133, %p134
      %p136 = scmp.ne.s32.totalorder %s125, %s128
      %p137 = scmp.eq.s32.totalorder %s17, 1
      %p138 = por %p136, %p137
      %p139 = scmp.ne.s32.totalorder %s128, %s129
      %p140 = scmp.eq.s32.totalorder %s17, 0
      %p141 = por %p139, %p140
      %p142 = scmp.ne.s32.totalorder %s128, %s129
      %p143 = scmp.eq.s32.totalorder %s18, 1
      %p144 = por %p142, %p143
      %p146 = scmp.ne.s32.totalorder %s129, %s145
      %p147 = scmp.eq.s32.totalorder %s18, 0
      %p148 = por %p146, %p147
      %p149 = scmp.le.s32.totalorder 1, %s12
      %p150 = scmp.lt.s32.totalorder %s12, 3
      %p151 = pnand %p149, %p150
      %p152 = pneg %p151
      // Predicated region
      $region9: #{tpu_custom_call.1} parent=5 // pred_check
        _
      $region10: #{tpu_custom_call.1} parent=5 // pred_check_branch
        %154 = sbr.rel (%p151) target = $region12
      $region11: #{tpu_custom_call.1} parent=5 // pred_region
        %s155 = ssub.s32 %s12, 1
        // Predicated region
        $region13: #{tpu_custom_call.1} parent=11 // pred_check
          %p156 = pneg %p57
        $region14: #{tpu_custom_call.1} parent=11 // pred_check_branch
          %158 = sbr.rel (%p156) target = $region16
        $region15: #{tpu_custom_call.1} parent=11 // pred_region
          %s159 = smul.u32 2, %s23
          %p160 = scmp.lt.s32.totalorder %s159, 1
          %s161 = scalar_select %p160, %s159, 1
          %s162 = smul.addr %s161, 4
          %s163 = scalar_lea.vmem %s0, %s162
          %s164 = smul.u32 2, %s23
        $region16: #{tpu_custom_call.1} parent=11 // pred_fallthru
          _
        // Predicated region
        $region17: #{tpu_custom_call.1} parent=11 // pred_check
          %p165 = pneg %p111
        $region18: #{tpu_custom_call.1} parent=11 // pred_check_branch
          %167 = sbr.rel (%p165) target = $region20
        $region19: #{tpu_custom_call.1} parent=11 // pred_region
          %s168 = smul.u32 2, %s23
          %p169 = scmp.lt.s32.totalorder %s168, 1
          %s170 = scalar_select %p169, %s168, 1
          %s171 = smul.addr %s170, 8
          %s172 = scalar_lea.vmem %s2, %s171
          %s173 = smul.u32 2, %s23
        $region20: #{tpu_custom_call.1} parent=11 // pred_fallthru
          _
      $region12: #{tpu_custom_call.1} parent=5 // pred_fallthru
        _
      %p174 = scmp.lt.s32.totalorder %s12, 2
      // Predicated region
      $region21: #{tpu_custom_call.1} parent=5 // pred_check
        %p175 = pneg %p174
      $region22: #{tpu_custom_call.1} parent=5 // pred_check_branch
        %177 = sbr.rel (%p175) target = $region24
      $region23: #{tpu_custom_call.1} parent=5 // pred_region
        // Predicated region
        $region25: #{tpu_custom_call.1} parent=23 // pred_check
          %p178 = pneg %p79
        $region26: #{tpu_custom_call.1} parent=23 // pred_check_branch
          %180 = sbr.rel (%p178) target = $region28
        $region27: #{tpu_custom_call.1} parent=23 // pred_region
          %p181 = scmp.lt.s32.totalorder %s19, 1
          %s182 = scalar_select %p181, %s19, 1
          %p183 = scmp.lt.s32.totalorder %s21, 0
          %s184 = scalar_select %p183, %s21, 0
          %s185 = sadd.s32 %s184, %s182
          %s186 = smul.addr %s185, 8
          %s187 = scalar_lea.vmem %s1, %s186
        $region28: #{tpu_custom_call.1} parent=23 // pred_fallthru
          _
      $region24: #{tpu_custom_call.1} parent=5 // pred_fallthru
        _
      %p188 = scmp.le.s32.totalorder 1, %s12
      %p189 = scmp.lt.s32.totalorder %s12, 3
      %p190 = pnand %p188, %p189
      %p191 = pneg %p190
      // Predicated region
      $region29: #{tpu_custom_call.1} parent=5 // pred_check
        _
      $region30: #{tpu_custom_call.1} parent=5 // pred_check_branch
        %193 = sbr.rel (%p190) target = $region32
      $region31: #{tpu_custom_call.1} parent=5 // pred_region
        %s194 = ssub.s32 %s12, 1
        %s195 = smul.u32 2, %s23
        %p196 = scmp.lt.s32.totalorder %s195, 1
        %s197 = scalar_select %p196, %s195, 1
        %s198 = smul.addr %s197, 4
        %s199 = scalar_lea.vmem %s0, %s198
        %p200 = pneg %p57
        %p201 = pneg %p54
        %p202 = scmp.lt.s32.totalorder %s22, 1
        %s203 = scalar_select %p202, %s22, 1
        %p204 = scmp.lt.s32.totalorder %s24, 0
        %s205 = scalar_select %p204, %s24, 0
        %s206 = sadd.s32 %s205, %s203
        %s207 = smul.addr %s206, 8
        %s208 = scalar_lea.vmem %s1, %s207
        %p209 = pneg %p85
        %p210 = pneg %p82
        %s211 = smul.u32 2, %s23
        %p212 = scmp.lt.s32.totalorder %s211, 1
        %s213 = scalar_select %p212, %s211, 1
        %s214 = smul.addr %s213, 8
        %s215 = scalar_lea.vmem %s2, %s214
        %p216 = pneg %p111
        %p217 = pneg %p108
        %p218 = pneg %p141
        %p219 = pneg %p138
        %s220 = sand.u32 %s128, 1
        %s221 = scalar_lea.sflag [#allocation3], %s220
        %s222 = sand.u32 %s128, 1
        %s223 = smul.addr %s222, 16
        %s224 = scalar_lea.vmem [#allocation2], %s223
        %s225 = smul.u32 2, %s23
        %p226 = scmp.lt.s32.totalorder %s225, 1
        %s227 = scalar_select %p226, %s225, 1
        %s228 = smul.addr %s227, 4
        %s229 = scalar_lea.vmem %s0, %s228
        %s230 = smul.u32 2, %s23
        %p231 = scmp.lt.s32.totalorder %s22, 1
        %s232 = scalar_select %p231, %s22, 1
        %p233 = scmp.lt.s32.totalorder %s24, 0
        %s234 = scalar_select %p233, %s24, 0
        %s235 = sadd.s32 %s234, %s232
        %s236 = smul.addr %s235, 8
        %s237 = scalar_lea.vmem %s1, %s236
        %s238 = smul.u32 2, %s23
        %p239 = scmp.lt.s32.totalorder %s238, 1
        %s240 = scalar_select %p239, %s238, 1
        %s241 = smul.addr %s240, 8
        %s242 = scalar_lea.vmem %s2, %s241
        %s243 = smul.u32 2, %s23
        %s244 = smul.u32 2, %s23
        %v246 = vld [vmem:[%s237] sm:$0xff]
        %v247 = vpack.c.bf16 %v246, %v246
        %v248 = vld [vmem:[%s229] sm:$0xf]
        %v249 = vld [vmem:[%s229 + $0x4] sm:$0xf]
        %v250 = vld [vmem:[%s242] sm:$0xff]
        %v251 = vld [vmem:[%s242 + $0x8] sm:$0xff]
        %253 = vset.pattern.permute.xlu0 0
        %254 = vperm.xlu0 %253, %v250
        %v255 = vpop.permute.xlu0 %254
        %258 = vset.pattern.permute.xlu0 0
        %259 = vperm.xlu0 %258, %v251
        %v260 = vpop.permute.xlu0 %259
        %v264 = vunpack.c.l.b16 %v248
        %v265 = vunpack.c.l.b16 %v249
        %v266 = vpack.c.b16 %v265, %v264
        %vm267 = vcmask 64512
        %v269 = vsel %vm267, %v266, 0
        %vm271 = vcmask 1043456
        %v273 = vsel %vm271, %v247, 0
        %275 = vmatprep.subr.bf16.mxu0 0
        %276 = vmatpush1.bf16.msra.mxu0 %v273
        %277 = vmatprep.subr.bf16.mxu0 0
        %278 = vmatpush1.bf16.msra.mxu0 0
        %279 = vmatprep.subr.bf16.mxu0 0
        %280 = vmatpush1.bf16.msra.mxu0 0
        %281 = vmatprep.subr.bf16.mxu0 0
        %282 = vmatpush1.bf16.msra.mxu0 0
        %283 = vmatprep.subr.bf16.mxu0 0
        %284 = vmatpush1.bf16.msra.mxu0 0
        %285 = vmatprep.subr.bf16.mxu0 0
        %286 = vmatpush1.bf16.msra.mxu0 0
        %287 = vmatprep.subr.bf16.mxu0 0
        %288 = vmatpush1.bf16.msra.mxu0 0
        %289 = vmatprep.subr.bf16.mxu0 0
        %290 = vmatpush1.bf16.msra.mxu0 0
        %291 = vmatprep.subr.bf16.mxu0 0
        %292 = vmatpush1.bf16.msra.mxu0 0
        %293 = vmatprep.subr.bf16.mxu0 0
        %294 = vmatpush1.bf16.msra.mxu0 0
        %295 = vmatprep.subr.bf16.mxu0 0
        %296 = vmatpush1.bf16.msra.mxu0 0
        %297 = vmatprep.subr.bf16.mxu0 0
        %298 = vmatpush1.bf16.msra.mxu0 0
        %299 = vmatprep.subr.bf16.mxu0 0
        %300 = vmatpush1.bf16.msra.mxu0 0
        %301 = vmatprep.subr.bf16.mxu0 0
        %302 = vmatpush1.bf16.msra.mxu0 0
        %303 = vmatprep.subr.bf16.mxu0 0
        %304 = vmatpush1.bf16.msra.mxu0 0
        %305 = vmatprep.subr.bf16.mxu0 0
        %306 = vmatpush1.bf16.msra.mxu0 0
        %307 = vmatprep.mubr.bf16.mxu0 0
        %308 = vmatmul.mubr.bf16.gmra.mrb[0].mxu0 %v269
        %v309 = vpop.f32.mrb[0].mxu0
        %v310 = vadd.f32 %v255, %v309
        %v311 = vpop.f32.mrb[0].mxu0
        %v312 = vpop.f32.mrb[0].mxu0
        %v313 = vadd.f32 %v260, %v312
        %v314 = vpop.f32.mrb[0].mxu0
        %315 = vdwg.mxu0
        %vm316 = vcmask 523264
        %317 = vst.msk [vmem:[%s224] sm:$0xff] %vm316, %v310
        %318 = vst.msk [vmem:[%s224 + $0x8] sm:$0xff] %vm316, %v313
        %s319 = sand.u32 %s128, 1
        %s320 = scalar_lea.sflag [#allocation3], %s319
        %s321 = sand.u32 %s128, 1
        %s322 = smul.addr %s321, 16
        %s323 = scalar_lea.vmem [#allocation2], %s322
        // Predicated region
        $region33: #{tpu_custom_call.1} parent=31 // pred_check
          %p324 = pneg %p138
        $region34: #{tpu_custom_call.1} parent=31 // pred_check_branch
          %326 = sbr.rel (%p324) target = $region36
        $region35: #{tpu_custom_call.1} parent=31 // pred_region
          %s327 = smul.u32 2, %s23
          %s329 = ssub.s32 256, 256
          %330 = vsyncadd %s320, %s329
          %s331 = sadd.s32 %s24, %s327
          %s332 = smul.addr %s22, 2
          %s333 = sadd.s32 %s331, %s332
          %s334 = smul.addr %s333, 128
          %s335 = scalar_lea.hbm %s3, %s334
          %s336 = sshll.u32 %s323, 4
          %s337 = int_to_ptr.vmem [resolvable:$true] %s336
          %342 = dma.vmem_to_hbm [thread:$0]  %s337, 256, %s335, %s320, 128, 128, 8
        $region36: #{tpu_custom_call.1} parent=31 // pred_fallthru
          _
      $region32: #{tpu_custom_call.1} parent=5 // pred_fallthru
        _
      %p343 = scmp.le.s32.totalorder 2, %s12
      // Predicated region
      $region37: #{tpu_custom_call.1} parent=5 // pred_check
        %p344 = pneg %p343
      $region38: #{tpu_custom_call.1} parent=5 // pred_check_branch
        %346 = sbr.rel (%p344) target = $region40
      $region39: #{tpu_custom_call.1} parent=5 // pred_region
        %s347 = ssub.s32 %s12, 2
        // Predicated region
        $region41: #{tpu_custom_call.1} parent=39 // pred_check
          %p348 = pneg %p144
        $region42: #{tpu_custom_call.1} parent=39 // pred_check_branch
          %350 = sbr.rel (%p348) target = $region44
        $region43: #{tpu_custom_call.1} parent=39 // pred_region
          %s351 = sand.u32 %s129, 1
          %s352 = scalar_lea.sflag [#allocation3], %s351
          %s353 = sand.u32 %s129, 1
          %s354 = smul.addr %s353, 16
          %s355 = scalar_lea.vmem [#allocation2], %s354
          %356 = dma.done %s352, 256
        $region44: #{tpu_custom_call.1} parent=39 // pred_fallthru
          _
      $region40: #{tpu_custom_call.1} parent=5 // pred_fallthru
        _
    $region6: #{tpu_custom_call.1} parent=1 // loop_footer
      %s16 = sadd.s32 1, %s12
    $region7: #{tpu_custom_call.1} parent=1 // loop_footer_branch
      %11 = sbr.rel target = $region3
    $region8: #{tpu_custom_call.1} parent=1 // loop_exit
      _
    %357 = vsyncpa [#allocation3], 1
    %s358 = scalar_lea.sflag [#allocation3], 1
    %359 = vsyncpa %s358, 1

// kernel: tpu_custom_call.1
$region0: #{tpu_custom_call.1}
  #allocation0 [shape = 'u32[]', space=smem, size = 0x4, offset = 0x4, fixed_abs, tag = 'smem constant byte address 0x4 - core index']
  #allocation1 [shape = 'u32[144,128]{1,0:T(1,128)}', space=vmem, size = 0x12000, scoped, tag = 'internal scratch']
  %s0 = inlined_call_operand.vmem [shape: bf16[16,8], index: 0, kind: input, shape index: {}]
  %s1 = inlined_call_operand.vmem [shape: f32[2,8,64], index: 1, kind: input, shape index: {}]
  %s2 = inlined_call_operand.vmem [shape: f32[16,1], index: 2, kind: input, shape index: {}]
  %s3 = inlined_call_operand.hbm [shape: f32[2,16,64], index: 3, kind: output, shape index: {}]
  %s4 = sld [smem:[#allocation0]]
  $region45: #{tpu_custom_call.1} parent=0
    _
  %s6 = ssub.s32 1, %s4
  %s7 = scalar_select 0, %s6, %s4
  $region1: #{tpu_custom_call.1} parent=0
    #allocation2 [shape = 'u8[16384]{0}', space=vmem, size = 0x4000, scoped, tag = 'output window, operand 0']
    #allocation3 [shape = 's32[2]{0}', space=sflag, size = 0x8, scoped, tag = 'scoped memory for tpu_custom_call.1']
    %8 = vsyncpa [#allocation3], 0
    %s9 = scalar_lea.sflag [#allocation3], 1
    %10 = vsyncpa %s9, 0
    loop: start=0, step=1, limit=4
    $region2: #{tpu_custom_call.1} parent=1 // loop_pre_header
      _
    $region3: #{tpu_custom_call.1} parent=1 // loop_header
      %s12 = sphi 0, %s16
      %p13 = scmp.ge.s32.totalorder %s12, 4
      %s19 = sphi 0, %s38
      %s20 = sphi 0, %s34
      %s21 = sphi 0, %s30
      %s22 = sphi 0, %s19
      %s23 = sphi 0, %s20
      %s24 = sphi 0, %s21
      %s25 = sphi 0, %s22
      %s26 = sphi 0, %s23
      %s27 = sphi 0, %s24
      %s41 = sphi 0, %s43
      %s44 = sphi 0, %s41
      %s45 = sphi 0, %s44
      %s61 = sphi 0, %s45
      %s69 = sphi 0, %s71
      %s72 = sphi 0, %s69
      %s73 = sphi 0, %s72
      %s89 = sphi 0, %s73
      %s95 = sphi 0, %s97
      %s98 = sphi 0, %s95
      %s99 = sphi 0, %s98
      %s115 = sphi 0, %s99
      %s125 = sphi 0, %s127
      %s128 = sphi 0, %s125
      %s129 = sphi 0, %s128
      %s145 = sphi 0, %s129
    $region4: #{tpu_custom_call.1} parent=1 // loop_header_branch
      %15 = sbr.rel (%p13) target = $region8
    $region5: #{tpu_custom_call.1} parent=1 // loop_body
      %s17 = ssub.s32 %s12, 1
      %s18 = ssub.s32 %s12, 2
      %s28 = sadd.s32 1, %s21
      %p29 = scmp.ge.s32.totalorder %s28, 1
      %s30 = scalar_select %p29, 0, %s28
      %s31 = sadd.s32 1, %s20
      %s32 = scalar_select %p29, %s31, %s20
      %p33 = scmp.ge.s32.totalorder %s32, 1
      %s34 = scalar_select %p33, 0, %s32
      %s35 = sadd.s32 1, %s19
      %s36 = scalar_select %p33, %s35, %s19
      %p37 = scmp.ge.s32.totalorder %s36, 2
      %s38 = scalar_select %p37, 0, %s36
      %s39 = ssub.s32 %s20, %s34
      %p40 = scmp.eq.s32.totalorder %s39, 0
      %s42 = sadd.s32 %s41, 1
      %s43 = scalar_select %p40, %s41, %s42
      %p46 = pneg %p40
      %p47 = scmp.eq.s32.totalorder %s12, 1
      %p48 = por %p46, %p47
      %p49 = scmp.ne.s32.totalorder %s41, %s44
      %p50 = scmp.eq.s32.totalorder %s12, 0
      %p51 = por %p49, %p50
      %p52 = scmp.ne.s32.totalorder %s41, %s44
      %p53 = scmp.eq.s32.totalorder %s17, 1
      %p54 = por %p52, %p53
      %p55 = scmp.ne.s32.totalorder %s44, %s45
      %p56 = scmp.eq.s32.totalorder %s17, 0
      %p57 = por %p55, %p56
      %p58 = scmp.ne.s32.totalorder %s44, %s45
      %p59 = scmp.eq.s32.totalorder %s18, 1
      %p60 = por %p58, %p59
      %p62 = scmp.ne.s32.totalorder %s45, %s61
      %p63 = scmp.eq.s32.totalorder %s18, 0
      %p64 = por %p62, %p63
      %s65 = ssub.s32 %s19, %s38
      %s66 = ssub.s32 %s21, %s30
      %s67 = sor.u32 %s65, %s66
      %p68 = scmp.eq.s32.totalorder %s67, 0
      %s70 = sadd.s32 %s69, 1
      %s71 = scalar_select %p68, %s69, %s70
      %p74 = pneg %p68
      %p75 = scmp.eq.s32.totalorder %s12, 1
      %p76 = por %p74, %p75
      %p77 = scmp.ne.s32.totalorder %s69, %s72
      %p78 = scmp.eq.s32.totalorder %s12, 0
      %p79 = por %p77, %p78
      %p80 = scmp.ne.s32.totalorder %s69, %s72
      %p81 = scmp.eq.s32.totalorder %s17, 1
      %p82 = por %p80, %p81
      %p83 = scmp.ne.s32.totalorder %s72, %s73
      %p84 = scmp.eq.s32.totalorder %s17, 0
      %p85 = por %p83, %p84
      %p86 = scmp.ne.s32.totalorder %s72, %s73
      %p87 = scmp.eq.s32.totalorder %s18, 1
      %p88 = por %p86, %p87
      %p90 = scmp.ne.s32.totalorder %s73, %s89
      %p91 = scmp.eq.s32.totalorder %s18, 0
      %p92 = por %p90, %p91
      %s93 = ssub.s32 %s20, %s34
      %p94 = scmp.eq.s32.totalorder %s93, 0
      %s96 = sadd.s32 %s95, 1
      %s97 = scalar_select %p94, %s95, %s96
      %p100 = pneg %p94
      %p101 = scmp.eq.s32.totalorder %s12, 1
      %p102 = por %p100, %p101
      %p103 = scmp.ne.s32.totalorder %s95, %s98
      %p104 = scmp.eq.s32.totalorder %s12, 0
      %p105 = por %p103, %p104
      %p106 = scmp.ne.s32.totalorder %s95, %s98
      %p107 = scmp.eq.s32.totalorder %s17, 1
      %p108 = por %p106, %p107
      %p109 = scmp.ne.s32.totalorder %s98, %s99
      %p110 = scmp.eq.s32.totalorder %s17, 0
      %p111 = por %p109, %p110
      %p112 = scmp.ne.s32.totalorder %s98, %s99
      %p113 = scmp.eq.s32.totalorder %s18, 1
      %p114 = por %p112, %p113
      %p116 = scmp.ne.s32.totalorder %s99, %s115
      %p117 = scmp.eq.s32.totalorder %s18, 0
      %p118 = por %p116, %p117
      %s119 = ssub.s32 %s19, %s38
      %s120 = ssub.s32 %s20, %s34
      %s121 = sor.u32 %s119, %s120
      %s122 = ssub.s32 %s21, %s30
      %s123 = sor.u32 %s121, %s122
      %p124 = scmp.eq.s32.totalorder %s123, 0
      %s126 = sadd.s32 %s125, 1
      %s127 = scalar_select %p124, %s125, %s126
      %p130 = pneg %p124
      %p131 = scmp.eq.s32.totalorder %s12, 1
      %p132 = por %p130, %p131
      %p133 = scmp.ne.s32.totalorder %s125, %s128
      %p134 = scmp.eq.s32.totalorder %s12, 0
      %p135 = por %p133, %p134
      %p136 = scmp.ne.s32.totalorder %s125, %s128
      %p137 = scmp.eq.s32.totalorder %s17, 1
      %p138 = por %p136, %p137
      %p139 = scmp.ne.s32.totalorder %s128, %s129
      %p140 = scmp.eq.s32.totalorder %s17, 0
      %p141 = por %p139, %p140
      %p142 = scmp.ne.s32.totalorder %s128, %s129
      %p143 = scmp.eq.s32.totalorder %s18, 1
      %p144 = por %p142, %p143
      %p146 = scmp.ne.s32.totalorder %s129, %s145
      %p147 = scmp.eq.s32.totalorder %s18, 0
      %p148 = por %p146, %p147
      %p149 = scmp.le.s32.totalorder 1, %s12
      %p150 = scmp.lt.s32.totalorder %s12, 3
      %p151 = pnand %p149, %p150
      %p152 = pneg %p151
      // Predicated region
      $region9: #{tpu_custom_call.1} parent=5 // pred_check
        _
      $region10: #{tpu_custom_call.1} parent=5 // pred_check_branch
        %154 = sbr.rel (%p151) target = $region12
      $region11: #{tpu_custom_call.1} parent=5 // pred_region
        %s155 = ssub.s32 %s12, 1
        // Predicated region
        $region13: #{tpu_custom_call.1} parent=11 // pred_check
          %p156 = pneg %p57
        $region14: #{tpu_custom_call.1} parent=11 // pred_check_branch
          %158 = sbr.rel (%p156) target = $region16
        $region15: #{tpu_custom_call.1} parent=11 // pred_region
          %s159 = smul.u32 2, %s23
          %p160 = scmp.lt.s32.totalorder %s159, 1
          %s161 = scalar_select %p160, %s159, 1
          %s162 = smul.addr %s161, 4
          %s163 = scalar_lea.vmem %s0, %s162
          %s164 = smul.u32 2, %s23
        $region16: #{tpu_custom_call.1} parent=11 // pred_fallthru
          _
        // Predicated region
        $region17: #{tpu_custom_call.1} parent=11 // pred_check
          %p165 = pneg %p111
        $region18: #{tpu_custom_call.1} parent=11 // pred_check_branch
          %167 = sbr.rel (%p165) target = $region20
        $region19: #{tpu_custom_call.1} parent=11 // pred_region
          %s168 = smul.u32 2, %s23
          %p169 = scmp.lt.s32.totalorder %s168, 1
          %s170 = scalar_select %p169, %s168, 1
          %s171 = smul.addr %s170, 8
          %s172 = scalar_lea.vmem %s2, %s171
          %s173 = smul.u32 2, %s23
        $region20: #{tpu_custom_call.1} parent=11 // pred_fallthru
          _
      $region12: #{tpu_custom_call.1} parent=5 // pred_fallthru
        _
      %p174 = scmp.lt.s32.totalorder %s12, 2
      // Predicated region
      $region21: #{tpu_custom_call.1} parent=5 // pred_check
        %p175 = pneg %p174
      $region22: #{tpu_custom_call.1} parent=5 // pred_check_branch
        %177 = sbr.rel (%p175) target = $region24
      $region23: #{tpu_custom_call.1} parent=5 // pred_region
        // Predicated region
        $region25: #{tpu_custom_call.1} parent=23 // pred_check
          %p178 = pneg %p79
        $region26: #{tpu_custom_call.1} parent=23 // pred_check_branch
          %180 = sbr.rel (%p178) target = $region28
        $region27: #{tpu_custom_call.1} parent=23 // pred_region
          %p181 = scmp.lt.s32.totalorder %s19, 1
          %s182 = scalar_select %p181, %s19, 1
          %p183 = scmp.lt.s32.totalorder %s21, 0
          %s184 = scalar_select %p183, %s21, 0
          %s185 = sadd.s32 %s184, %s182
          %s186 = smul.addr %s185, 8
          %s187 = scalar_lea.vmem %s1, %s186
        $region28: #{tpu_custom_call.1} parent=23 // pred_fallthru
          _
      $region24: #{tpu_custom_call.1} parent=5 // pred_fallthru
        _
      %p188 = scmp.le.s32.totalorder 1, %s12
      %p189 = scmp.lt.s32.totalorder %s12, 3
      %p190 = pnand %p188, %p189
      %p191 = pneg %p190
      // Predicated region
      $region29: #{tpu_custom_call.1} parent=5 // pred_check
        _
      $region30: #{tpu_custom_call.1} parent=5 // pred_check_branch
        %193 = sbr.rel (%p190) target = $region32
      $region31: #{tpu_custom_call.1} parent=5 // pred_region
        %s194 = ssub.s32 %s12, 1
        %s195 = smul.u32 2, %s23
        %p196 = scmp.lt.s32.totalorder %s195, 1
        %s197 = scalar_select %p196, %s195, 1
        %s198 = smul.addr %s197, 4
        %s199 = scalar_lea.vmem %s0, %s198
        %p200 = pneg %p57
        %p201 = pneg %p54
        %p202 = scmp.lt.s32.totalorder %s22, 1
        %s203 = scalar_select %p202, %s22, 1
        %p204 = scmp.lt.s32.totalorder %s24, 0
        %s205 = scalar_select %p204, %s24, 0
        %s206 = sadd.s32 %s205, %s203
        %s207 = smul.addr %s206, 8
        %s208 = scalar_lea.vmem %s1, %s207
        %p209 = pneg %p85
        %p210 = pneg %p82
        %s211 = smul.u32 2, %s23
        %p212 = scmp.lt.s32.totalorder %s211, 1
        %s213 = scalar_select %p212, %s211, 1
        %s214 = smul.addr %s213, 8
        %s215 = scalar_lea.vmem %s2, %s214
        %p216 = pneg %p111
        %p217 = pneg %p108
        %p218 = pneg %p141
        %p219 = pneg %p138
        %s220 = sand.u32 %s128, 1
        %s221 = scalar_lea.sflag [#allocation3], %s220
        %s222 = sand.u32 %s128, 1
        %s223 = smul.addr %s222, 16
        %s224 = scalar_lea.vmem [#allocation2], %s223
        %s225 = smul.u32 2, %s23
        %p226 = scmp.lt.s32.totalorder %s225, 1
        %s227 = scalar_select %p226, %s225, 1
        %s228 = smul.addr %s227, 4
        %s229 = scalar_lea.vmem %s0, %s228
        %s230 = smul.u32 2, %s23
        %p231 = scmp.lt.s32.totalorder %s22, 1
        %s232 = scalar_select %p231, %s22, 1
        %p233 = scmp.lt.s32.totalorder %s24, 0
        %s234 = scalar_select %p233, %s24, 0
        %s235 = sadd.s32 %s234, %s232
        %s236 = smul.addr %s235, 8
        %s237 = scalar_lea.vmem %s1, %s236
        %s238 = smul.u32 2, %s23
        %p239 = scmp.lt.s32.totalorder %s238, 1
        %s240 = scalar_select %p239, %s238, 1
        %s241 = smul.addr %s240, 8
        %s242 = scalar_lea.vmem %s2, %s241
        %s243 = smul.u32 2, %s23
        %s244 = smul.u32 2, %s23
        %v246 = vld [vmem:[%s237] sm:$0xff]
        %v247 = vpack.c.bf16 %v246, %v246
        %v248 = vld [vmem:[%s229] sm:$0xf]
        %v249 = vld [vmem:[%s229 + $0x4] sm:$0xf]
        %v250 = vld [vmem:[%s242] sm:$0xff]
        %v251 = vld [vmem:[%s242 + $0x8] sm:$0xff]
        %253 = vset.pattern.permute.xlu0 0
        %254 = vperm.xlu0 %253, %v250
        %v255 = vpop.permute.xlu0 %254
        %258 = vset.pattern.permute.xlu0 0
        %259 = vperm.xlu0 %258, %v251
        %v260 = vpop.permute.xlu0 %259
        %v264 = vunpack.c.l.b16 %v248
        %v265 = vunpack.c.l.b16 %v249
        %v266 = vpack.c.b16 %v265, %v264
        %vm267 = vcmask 64512
        %v269 = vsel %vm267, %v266, 0
        %vm271 = vcmask 1043456
        %v273 = vsel %vm271, %v247, 0
        %275 = vmatprep.subr.bf16.mxu0 0
        %276 = vmatpush1.bf16.msra.mxu0 %v273
        %277 = vmatprep.subr.bf16.mxu0 0
        %278 = vmatpush1.bf16.msra.mxu0 0
        %279 = vmatprep.subr.bf16.mxu0 0
        %280 = vmatpush1.bf16.msra.mxu0 0
        %281 = vmatprep.subr.bf16.mxu0 0
        %282 = vmatpush1.bf16.msra.mxu0 0
        %283 = vmatprep.subr.bf16.mxu0 0
        %284 = vmatpush1.bf16.msra.mxu0 0
        %285 = vmatprep.subr.bf16.mxu0 0
        %286 = vmatpush1.bf16.msra.mxu0 0
        %287 = vmatprep.subr.bf16.mxu0 0
        %288 = vmatpush1.bf16.msra.mxu0 0
        %289 = vmatprep.subr.bf16.mxu0 0
        %290 = vmatpush1.bf16.msra.mxu0 0
        %291 = vmatprep.subr.bf16.mxu0 0
        %292 = vmatpush1.bf16.msra.mxu0 0
        %293 = vmatprep.subr.bf16.mxu0 0
        %294 = vmatpush1.bf16.msra.mxu0 0
        %295 = vmatprep.subr.bf16.mxu0 0
        %296 = vmatpush1.bf16.msra.mxu0 0
        %297 = vmatprep.subr.bf16.mxu0 0
        %298 = vmatpush1.bf16.msra.mxu0 0
        %299 = vmatprep.subr.bf16.mxu0 0
        %300 = vmatpush1.bf16.msra.mxu0 0
        %301 = vmatprep.subr.bf16.mxu0 0
        %302 = vmatpush1.bf16.msra.mxu0 0
        %303 = vmatprep.subr.bf16.mxu0 0
        %304 = vmatpush1.bf16.msra.mxu0 0
        %305 = vmatprep.subr.bf16.mxu0 0
        %306 = vmatpush1.bf16.msra.mxu0 0
        %307 = vmatprep.mubr.bf16.mxu0 0
        %308 = vmatmul.mubr.bf16.gmra.mrb[0].mxu0 %v269
        %v309 = vpop.f32.mrb[0].mxu0
        %v310 = vadd.f32 %v255, %v309
        %v311 = vpop.f32.mrb[0].mxu0
        %v312 = vpop.f32.mrb[0].mxu0
        %v313 = vadd.f32 %v260, %v312
        %v314 = vpop.f32.mrb[0].mxu0
        %315 = vdwg.mxu0
        %vm316 = vcmask 523264
        %317 = vst.msk [vmem:[%s224] sm:$0xff] %vm316, %v310
        %318 = vst.msk [vmem:[%s224 + $0x8] sm:$0xff] %vm316, %v313
        %s319 = sand.u32 %s128, 1
        %s320 = scalar_lea.sflag [#allocation3], %s319
        %s321 = sand.u32 %s128, 1
        %s322 = smul.addr %s321, 16
        %s323 = scalar_lea.vmem [#allocation2], %s322
        // Predicated region
        $region33: #{tpu_custom_call.1} parent=31 // pred_check
          %p324 = pneg %p138
        $region34: #{tpu_custom_call.1} parent=31 // pred_check_branch
          %326 = sbr.rel (%p324) target = $region36
        $region35: #{tpu_custom_call.1} parent=31 // pred_region
          %s327 = smul.u32 2, %s23
          %s329 = ssub.s32 256, 256
          %330 = vsyncadd %s320, %s329
          %s331 = sadd.s32 %s24, %s327
          %s332 = smul.addr %s22, 2
          %s333 = sadd.s32 %s331, %s332
          %s334 = smul.addr %s333, 128
          %s335 = scalar_lea.hbm %s3, %s334
          %s336 = sshll.u32 %s323, 4
          %s337 = int_to_ptr.vmem [resolvable:$true] %s336
          %342 = dma.vmem_to_hbm [thread:$0]  %s337, 256, %s335, %s320, 128, 128, 8
        $region36: #{tpu_custom_call.1} parent=31 // pred_fallthru
          _
      $region32: #{tpu_custom_call.1} parent=5 // pred_fallthru
        _
      %p343 = scmp.le.s32.totalorder 2, %s12
      // Predicated region
      $region37: #{tpu_custom_call.1} parent=5 // pred_check
        %p344 = pneg %p343
      $region38: #{tpu_custom_call.1} parent=5 // pred_check_branch
        %346 = sbr.rel (%p344) target = $region40
      $region39: #{tpu_custom_call.1} parent=5 // pred_region
        %s347 = ssub.s32 %s12, 2
        // Predicated region
        $region41: #{tpu_custom_call.1} parent=39 // pred_check
          %p348 = pneg %p144
        $region42: #{tpu_custom_call.1} parent=39 // pred_check_branch
          %350 = sbr.rel (%p348) target = $region44
        $region43: #{tpu_custom_call.1} parent=39 // pred_region
          %s351 = sand.u32 %s129, 1
          %s352 = scalar_lea.sflag [#allocation3], %s351
          %s353 = sand.u32 %s129, 1
          %s354 = smul.addr %s353, 16
          %s355 = scalar_lea.vmem [#allocation2], %s354
          %356 = dma.done %s352, 256
        $region44: #{tpu_custom_call.1} parent=39 // pred_fallthru
          _
      $region40: #{tpu_custom_call.1} parent=5 // pred_fallthru
        _
    $region6: #{tpu_custom_call.1} parent=1 // loop_footer
      %s16 = sadd.s32 1, %s12
    $region7: #{tpu_custom_call.1} parent=1 // loop_footer_branch
      %11 = sbr.rel target = $region3
    $region8: #{tpu_custom_call.1} parent=1 // loop_exit
      _
    %357 = vsyncpa [#allocation3], 1
    %s358 = scalar_lea.sflag [#allocation3], 1
    %359 = vsyncpa %s358, 1

</llo_original>
